<compile_context>
chip_gen: v7x
topology: tpu7x:2x2x1
jax: 0.10.0
libtpu: 0.0.40
codegen_flags: <defaults>
</compile_context>

<pallas_src>
import jax
import jax.numpy as jnp
from jax.experimental import pallas as pl
from jax.experimental.pallas import tpu as pltpu

HIDDEN = 32  # fixed hidden width from the module: Linear(in, 32) -> Linear(32, m)


def _round_up(x, m):
    return ((x + m - 1) // m) * m


def _mlp_kernel(u_ref, w1_ref, b1_ref, w2_ref, b2_ref, o_ref, h_ref):
    # First Linear only once per batch tile (j == 0); cache in VMEM scratch.
    @pl.when(pl.program_id(1) == 0)
    def _():
        h = jnp.dot(u_ref[...], w1_ref[...],
                    preferred_element_type=jnp.float32) + b1_ref[...]
        h_ref[...] = h.astype(h_ref.dtype)

    # Second Linear: (TM, 32) @ (32, TN) on the MXU, f32 accumulate, fused
    # bias + ReLU epilogue before the single lane-dense store.
    out = jnp.dot(h_ref[...], w2_ref[...],
                  preferred_element_type=jnp.float32) + b2_ref[...]
    o_ref[...] = jnp.maximum(out, 0.0).astype(o_ref.dtype)


def embedding4initializer_forward(U, w1, b1, w2, b2, *,
                                  compute_dtype=jnp.float32,
                                  tm_max=512, tn_max=512):
    """Pallas TPU forward of Embedding4Initializer.

    U : (B, in_features) f32
    w1: (in_features, 32) f32   (= PyTorch Linear.weight.T)
    b1: (1, 32) f32
    w2: (32, out_features) f32  (= PyTorch Linear.weight.T)
    b2: (1, out_features) f32
    compute_dtype: dtype fed to the MXU (f32 or bf16); accumulation is always f32.
    returns (B, out_features) f32
    """
    B, in_features = U.shape
    out_features = w2.shape[1]
    assert w1.shape == (in_features, HIDDEN)
    assert b1.shape == (1, HIDDEN)
    assert w2.shape == (HIDDEN, out_features)
    assert b2.shape == (1, out_features)
    assert tm_max % 8 == 0 and tn_max % 128 == 0

    # ---- tile selection -------------------------------------------------
    # Batch tile: multiple of 8 (f32 sublane).  Adaptive cap keeps each U
    # block around ~2 MiB so the double-buffered footprint stays well inside
    # the scoped VMEM limit even for large in_features.
    itemsize = jnp.dtype(compute_dtype).itemsize
    bytes_per_row = max(1, in_features * itemsize)
    rows_fit = max(8, ((2 << 20) // bytes_per_row) // 8 * 8)
    tm_eff = min(tm_max, rows_fit)
    if B <= tm_eff:
        TM = _round_up(B, 8)           # single batch tile
    else:
        TM = tm_eff
    B_pad = _round_up(B, TM)

    # Out-feature tile: either the full dim (small m) or a multiple of 128
    # (lane-dense unmasked stores) when m is large.
    if out_features <= tn_max:
        TN = out_features              # single N tile == full dim
    else:
        TN = tn_max
    N_pad = _round_up(out_features, TN)

    # ---- wrapper-side padding so every block is full --------------------
    if B_pad != B:
        U = jnp.pad(U, ((0, B_pad - B), (0, 0)))
    if N_pad != out_features:
        w2 = jnp.pad(w2, ((0, 0), (0, N_pad - out_features)))
        b2 = jnp.pad(b2, ((0, 0), (0, N_pad - out_features)))

    # Narrow MXU operands; bias-add + ReLU epilogue stays f32 (v5e has no bf16 VPU).
    U_c = U.astype(compute_dtype)
    w1_c = w1.astype(compute_dtype)
    w2_c = w2.astype(compute_dtype)
    b1_f = b1.astype(jnp.float32)
    b2_f = b2.astype(jnp.float32)

    grid = (B_pad // TM, N_pad // TN)

    flops = 2 * B * HIDDEN * (in_features + out_features)
    bytes_accessed = (
        U_c.size * U_c.dtype.itemsize
        + w1_c.size * w1_c.dtype.itemsize
        + w2_c.size * w2_c.dtype.itemsize
        + b1_f.size * 4 + b2_f.size * 4
        + B_pad * N_pad * 4
    )

    out_padded = pl.pallas_call(
        _mlp_kernel,
        out_shape=jax.ShapeDtypeStruct((B_pad, N_pad), jnp.float32),
        grid=grid,
        in_specs=[
            pl.BlockSpec((TM, in_features), lambda i, j: (i, 0)),       # U: batch-tiled
            pl.BlockSpec((in_features, HIDDEN), lambda i, j: (0, 0)),   # w1: resident
            pl.BlockSpec((1, HIDDEN), lambda i, j: (0, 0)),             # b1: resident
            pl.BlockSpec((HIDDEN, TN), lambda i, j: (0, j)),            # w2: N-tiled
            pl.BlockSpec((1, TN), lambda i, j: (0, j)),                 # b2: N-tiled
        ],
        out_specs=pl.BlockSpec((TM, TN), lambda i, j: (i, j)),
        scratch_shapes=[pltpu.VMEM((TM, HIDDEN), compute_dtype)],       # cached hidden
        compiler_params=pltpu.CompilerParams(
            # N axis sequential per core so the hidden-activation cache is
            # valid; batch axis sharded across cores on megacore parts.
            dimension_semantics=("parallel", "arbitrary"),
        ),
        cost_estimate=pl.CostEstimate(
            flops=flops, transcendentals=0, bytes_accessed=bytes_accessed),
    )(U_c, w1_c, b1_f, w2_c, b2_f)

    return out_padded[:B, :out_features]


def init_params(key, in_features, out_features):
    """Deterministic init matching PyTorch Linear default U(-1/sqrt(fan_in), 1/sqrt(fan_in))."""
    k1, k2, k3, k4 = jax.random.split(key, 4)
    lim1 = 1.0 / jnp.sqrt(in_features)
    lim2 = 1.0 / jnp.sqrt(HIDDEN)
    w1 = jax.random.uniform(k1, (in_features, HIDDEN), jnp.float32, -lim1, lim1)
    b1 = jax.random.uniform(k2, (1, HIDDEN), jnp.float32, -lim1, lim1)
    w2 = jax.random.uniform(k3, (HIDDEN, out_features), jnp.float32, -lim2, lim2)
    b2 = jax.random.uniform(k4, (1, out_features), jnp.float32, -lim2, lim2)
    return w1, b1, w2, b2


if __name__ == "__main__":
    key = jax.random.PRNGKey(0)
    ku, kp = jax.random.split(key)

    # Small shapes consistent with the module.
    in_features, out_features, batch = 16, 8, 8
    U = jax.random.normal(ku, (batch, in_features), jnp.float32)
    w1, b1, w2, b2 = init_params(kp, in_features, out_features)
    ref = jnp.maximum((U @ w1 + b1) @ w2 + b2, 0.0)

    # f32 path (single tile).
    out = jax.block_until_ready(embedding4initializer_forward(U, w1, b1, w2, b2))
    assert out.shape == (batch, out_features)
    assert jnp.allclose(out, ref, atol=1e-5, rtol=1e-5)

    # bf16 MXU-operand path (f32 accumulate) — loosened tolerance.
    out_bf16 = jax.block_until_ready(
        embedding4initializer_forward(U, w1, b1, w2, b2, compute_dtype=jnp.bfloat16))
    assert out_bf16.shape == (batch, out_features)
    assert jnp.allclose(out_bf16, ref, atol=1e-1, rtol=5e-2)

    # Exercise the tiled + padded grid path with deliberately tiny tile caps
    # (batch not a multiple of the tile, out_features not a multiple of 128,
    # multiple N tiles so the hidden-activation cache path is used).
    batch2, out2 = 20, 200
    U2 = jax.random.normal(ku, (batch2, in_features), jnp.float32)
    w1b, b1b, w2b, b2b = init_params(kp, in_features, out2)
    ref2 = jnp.maximum((U2 @ w1b + b1b) @ w2b + b2b, 0.0)
    out2_k = jax.block_until_ready(
        embedding4initializer_forward(U2, w1b, b1b, w2b, b2b, tm_max=16, tn_max=128))
    assert out2_k.shape == (batch2, out2)
    assert jnp.allclose(out2_k, ref2, atol=1e-4, rtol=1e-4)

    print("KERNEL_OK")
</pallas_src>

<mosaic_0001>
module attributes {stable_mosaic.version = 11 : i64} {
  func.func @_mlp_kernel(%arg0: i32, %arg1: i32, %arg2: memref<8x16xf32, #tpu.memory_space<vmem>>, %arg3: memref<16x32xf32, #tpu.memory_space<vmem>>, %arg4: memref<1x32xf32, #tpu.memory_space<vmem>>, %arg5: memref<32x8xf32, #tpu.memory_space<vmem>>, %arg6: memref<1x8xf32, #tpu.memory_space<vmem>>, %arg7: memref<8x8xf32, #tpu.memory_space<vmem>>, %arg8: memref<8x32xf32, #tpu.memory_space<vmem>>) attributes {dimension_semantics = [#tpu.dimension_semantics<parallel>, #tpu.dimension_semantics<arbitrary>], iteration_bounds = array<i64: 1, 1>, scalar_prefetch = 0 : i64, scratch_operands = 1 : i64, tpu.core_type = #tpu.core_type<tc>, window_params = [{transform_indices = @transform_0, window_bounds = array<i64: 8, 16>}, {pipeline_mode = #tpu.pipeline_mode<synchronous>, transform_indices = @transform_1, window_bounds = array<i64: 16, 32>}, {pipeline_mode = #tpu.pipeline_mode<synchronous>, transform_indices = @transform_2, window_bounds = array<i64: 1, 32>}, {transform_indices = @transform_3, window_bounds = array<i64: 32, 8>}, {transform_indices = @transform_4, window_bounds = array<i64: 1, 8>}, {transform_indices = @transform_5, window_bounds = array<i64: 8, 8>}]} {
    %c0_i32 = arith.constant 0 : i32
    %0 = arith.cmpi eq, %arg1, %c0_i32 : i32
    %1 = arith.extui %0 : i1 to i32
    %c0_i32_0 = arith.constant 0 : i32
    %2 = arith.cmpi ne, %1, %c0_i32_0 : i32
    scf.if %2 {
      %c0_9 = arith.constant 0 : index
      %c0_10 = arith.constant 0 : index
      %12 = vector.load %arg2[%c0_9, %c0_10] : memref<8x16xf32, #tpu.memory_space<vmem>>, vector<8x16xf32>
      %c0_11 = arith.constant 0 : index
      %c0_12 = arith.constant 0 : index
      %13 = vector.load %arg3[%c0_11, %c0_12] : memref<16x32xf32, #tpu.memory_space<vmem>>, vector<16x32xf32>
      %cst_13 = arith.constant dense<0.000000e+00> : vector<8x32xf32>
      %14 = tpu.matmul %12, %13, %cst_13 {dimension_numbers = #tpu.dot_dimension_numbers<[1], [0], [0], [1], [0, 0, 1, 1], [], []>} : vector<8x16xf32>, vector<16x32xf32>, vector<8x32xf32> -> vector<8x32xf32>
      %c0_14 = arith.constant 0 : index
      %c0_15 = arith.constant 0 : index
      %15 = vector.load %arg4[%c0_14, %c0_15] : memref<1x32xf32, #tpu.memory_space<vmem>>, vector<1x32xf32>
      %16 = vector.broadcast %15 : vector<1x32xf32> to vector<8x32xf32>
      %17 = arith.addf %14, %16 : vector<8x32xf32>
      %c0_16 = arith.constant 0 : index
      %c0_17 = arith.constant 0 : index
      %18 = vector.load %arg8[%c0_16, %c0_17] : memref<8x32xf32, #tpu.memory_space<vmem>>, vector<8x32xf32>
      tpu.vector_store %arg8[%c0_16, %c0_17], %17 {strides = array<i32>} : memref<8x32xf32, #tpu.memory_space<vmem>>, vector<8x32xf32>,
    } else {
    }
    %c0 = arith.constant 0 : index
    %c0_1 = arith.constant 0 : index
    %3 = vector.load %arg8[%c0, %c0_1] : memref<8x32xf32, #tpu.memory_space<vmem>>, vector<8x32xf32>
    %c0_2 = arith.constant 0 : index
    %c0_3 = arith.constant 0 : index
    %4 = vector.load %arg5[%c0_2, %c0_3] : memref<32x8xf32, #tpu.memory_space<vmem>>, vector<32x8xf32>
    %cst = arith.constant dense<0.000000e+00> : vector<8x8xf32>
    %5 = tpu.matmul %3, %4, %cst {dimension_numbers = #tpu.dot_dimension_numbers<[1], [0], [0], [1], [0, 0, 1, 1], [], []>} : vector<8x32xf32>, vector<32x8xf32>, vector<8x8xf32> -> vector<8x8xf32>
    %c0_4 = arith.constant 0 : index
    %c0_5 = arith.constant 0 : index
    %6 = vector.load %arg6[%c0_4, %c0_5] : memref<1x8xf32, #tpu.memory_space<vmem>>, vector<1x8xf32>
    %7 = vector.broadcast %6 : vector<1x8xf32> to vector<8x8xf32>
    %8 = arith.addf %5, %7 : vector<8x8xf32>
    %cst_6 = arith.constant 0.000000e+00 : f32
    %9 = vector.broadcast %cst_6 : f32 to vector<8x8xf32>
    %10 = arith.maximumf %8, %9 : vector<8x8xf32>
    %c0_7 = arith.constant 0 : index
    %c0_8 = arith.constant 0 : index
    %11 = vector.load %arg7[%c0_7, %c0_8] : memref<8x8xf32, #tpu.memory_space<vmem>>, vector<8x8xf32>
    tpu.vector_store %arg7[%c0_7, %c0_8], %10 {strides = array<i32>} : memref<8x8xf32, #tpu.memory_space<vmem>>, vector<8x8xf32>,
    return
  }
  func.func @transform_0(%arg0: i32, %arg1: i32) -> (i32, i32) {
    %c0_i32 = arith.constant 0 : i32
    %c0_i32_0 = arith.constant 0 : i32
    return %arg0, %c0_i32 : i32, i32
  }
  func.func @transform_1(%arg0: i32, %arg1: i32) -> (i32, i32) {
    %c0_i32 = arith.constant 0 : i32
    %c0_i32_0 = arith.constant 0 : i32
    %c0_i32_1 = arith.constant 0 : i32
    return %c0_i32, %c0_i32_0 : i32, i32
  }
  func.func @transform_2(%arg0: i32, %arg1: i32) -> (i32, i32) {
    %c0_i32 = arith.constant 0 : i32
    %c0_i32_0 = arith.constant 0 : i32
    %c0_i32_1 = arith.constant 0 : i32
    return %c0_i32, %c0_i32_0 : i32, i32
  }
  func.func @transform_3(%arg0: i32, %arg1: i32) -> (i32, i32) {
    %c0_i32 = arith.constant 0 : i32
    %c0_i32_0 = arith.constant 0 : i32
    return %c0_i32, %arg1 : i32, i32
  }
  func.func @transform_4(%arg0: i32, %arg1: i32) -> (i32, i32) {
    %c0_i32 = arith.constant 0 : i32
    %c0_i32_0 = arith.constant 0 : i32
    return %c0_i32, %arg1 : i32, i32
  }
  func.func @transform_5(%arg0: i32, %arg1: i32) -> (i32, i32) {
    %c0_i32 = arith.constant 0 : i32
    return %arg0, %arg1 : i32, i32
  }
}

</mosaic_0001>

<llo_original>
// kernel: tpu_custom_call.1
$region0: #{tpu_custom_call.1}
  #allocation0 [shape = 'u32[]', space=smem, size = 0x4, offset = 0x4, fixed_abs, tag = 'smem constant byte address 0x4 - core index']
  #allocation1 [shape = 'u32[144,128]{1,0:T(1,128)}', space=vmem, size = 0x12000, scoped, tag = 'internal scratch']
  #allocation2 [shape = 'f32[8,32]{1,0:T(8,128)}', space=vmem, size = 0x1000, scoped, tag = 'scratch operand']
  %s0 = inlined_call_operand.vmem [shape: f32[8,16], index: 0, kind: input, shape index: {}]
  %s1 = inlined_call_operand.vmem [shape: f32[16,32], index: 1, kind: input, shape index: {}]
  %s2 = inlined_call_operand.vmem [shape: f32[1,32], index: 2, kind: input, shape index: {}]
  %s3 = inlined_call_operand.vmem [shape: f32[32,8], index: 3, kind: input, shape index: {}]
  %s4 = inlined_call_operand.vmem [shape: f32[1,8], index: 4, kind: input, shape index: {}]
  %s5 = inlined_call_operand.hbm [shape: f32[8,8], index: 5, kind: output, shape index: {}]
  %s6 = sld [smem:[#allocation0]]
  $region34: #{tpu_custom_call.1} parent=0
    _
  %s8 = ssub.s32 1, %s6
  %s9 = scalar_select 0, %s8, %s6
  $region1: #{tpu_custom_call.1} parent=0
    #allocation3 [shape = 'u8[4096]{0}', space=vmem, size = 0x1000, scoped, tag = 'output window, operand 0, single buffered']
    #allocation4 [shape = 's32[1]{0}', space=sflag, size = 0x4, scoped, tag = 'scoped memory for tpu_custom_call.1']
    %10 = vsyncpa [#allocation4], 0
    // Predicated region
    $region2: #{tpu_custom_call.1} parent=1 // pred_check
      _
    $region3: #{tpu_custom_call.1} parent=1 // pred_check_branch
      %12 = sbr.rel (0) target = $region5
    $region4: #{tpu_custom_call.1} parent=1 // pred_region
      _
    $region5: #{tpu_custom_call.1} parent=1 // pred_fallthru
      _
    // Predicated region
    $region6: #{tpu_custom_call.1} parent=1 // pred_check
      _
    $region7: #{tpu_custom_call.1} parent=1 // pred_check_branch
      %14 = sbr.rel (0) target = $region9
    $region8: #{tpu_custom_call.1} parent=1 // pred_region
      _
    $region9: #{tpu_custom_call.1} parent=1 // pred_fallthru
      _
    // Predicated region
    $region10: #{tpu_custom_call.1} parent=1 // pred_check
      _
    $region11: #{tpu_custom_call.1} parent=1 // pred_check_branch
      %16 = sbr.rel (0) target = $region13
    $region12: #{tpu_custom_call.1} parent=1 // pred_region
      _
    $region13: #{tpu_custom_call.1} parent=1 // pred_fallthru
      _
    // Predicated region
    $region14: #{tpu_custom_call.1} parent=1 // pred_check
      _
    $region15: #{tpu_custom_call.1} parent=1 // pred_check_branch
      %18 = sbr.rel (0) target = $region17
    $region16: #{tpu_custom_call.1} parent=1 // pred_region
      _
    $region17: #{tpu_custom_call.1} parent=1 // pred_fallthru
      _
    // Predicated region
    $region18: #{tpu_custom_call.1} parent=1 // pred_check
      _
    $region19: #{tpu_custom_call.1} parent=1 // pred_check_branch
      %20 = sbr.rel (0) target = $region21
    $region20: #{tpu_custom_call.1} parent=1 // pred_region
      _
    $region21: #{tpu_custom_call.1} parent=1 // pred_fallthru
      _
    %p21 = scmp.eq.s32.totalorder 0, 0
    // Predicated region
    $region22: #{tpu_custom_call.1} parent=1 // pred_check
      %p22 = pneg %p21
    $region23: #{tpu_custom_call.1} parent=1 // pred_check_branch
      %24 = sbr.rel (%p22) target = $region25
    $region24: #{tpu_custom_call.1} parent=1 // pred_region
      %v25 = vld [vmem:[%s0] sm:$0xff]
      %v26 = vld [vmem:[%s1] sm:$0xff]
      %v27 = vld [vmem:[%s1 + $0x8] sm:$0xff]
      %v28 = vld [vmem:[%s2] sm:$0x1]
      %v30 = vlaneseq
      %v31 = vshrl.u32 %v30, 7
      %v32 = vsub.s32 0, %v31
      %v33 = vrot.slane %v28, %v32
      %vm35 = vcmask 130048
      %v37 = vsel %vm35, %v25, 0
      %39 = vmatprep.subr.mxu0 0.0
      %40 = vmatpush1.msra.mxu0 %v26
      %41 = vmatprep.subr.mxu0 0.0
      %42 = vmatpush1.msra.mxu0 %v27
      %43 = vmatprep.subr.mxu0 0.0
      %44 = vmatpush1.msra.mxu0 0.0
      %45 = vmatprep.subr.mxu0 0.0
      %46 = vmatpush1.msra.mxu0 0.0
      %47 = vmatprep.subr.mxu0 0.0
      %48 = vmatpush1.msra.mxu0 0.0
      %49 = vmatprep.subr.mxu0 0.0
      %50 = vmatpush1.msra.mxu0 0.0
      %51 = vmatprep.subr.mxu0 0.0
      %52 = vmatpush1.msra.mxu0 0.0
      %53 = vmatprep.subr.mxu0 0.0
      %54 = vmatpush1.msra.mxu0 0.0
      %55 = vmatprep.subr.mxu0 0.0
      %56 = vmatpush1.msra.mxu0 0.0
      %57 = vmatprep.subr.mxu0 0.0
      %58 = vmatpush1.msra.mxu0 0.0
      %59 = vmatprep.subr.mxu0 0.0
      %60 = vmatpush1.msra.mxu0 0.0
      %61 = vmatprep.subr.mxu0 0.0
      %62 = vmatpush1.msra.mxu0 0.0
      %63 = vmatprep.subr.mxu0 0.0
      %64 = vmatpush1.msra.mxu0 0.0
      %65 = vmatprep.subr.mxu0 0.0
      %66 = vmatpush1.msra.mxu0 0.0
      %67 = vmatprep.subr.mxu0 0.0
      %68 = vmatpush1.msra.mxu0 0.0
      %69 = vmatprep.subr.mxu0 0.0
      %70 = vmatpush1.msra.mxu0 0.0
      %71 = vmatprep.subr.mxu0 0.0
      %72 = vmatpush1.msra.mxu0 0.0
      %73 = vmatprep.subr.mxu0 0.0
      %74 = vmatpush1.msra.mxu0 0.0
      %75 = vmatprep.subr.mxu0 0.0
      %76 = vmatpush1.msra.mxu0 0.0
      %77 = vmatprep.subr.mxu0 0.0
      %78 = vmatpush1.msra.mxu0 0.0
      %79 = vmatprep.subr.mxu0 0.0
      %80 = vmatpush1.msra.mxu0 0.0
      %81 = vmatprep.subr.mxu0 0.0
      %82 = vmatpush1.msra.mxu0 0.0
      %83 = vmatprep.subr.mxu0 0.0
      %84 = vmatpush1.msra.mxu0 0.0
      %85 = vmatprep.subr.mxu0 0.0
      %86 = vmatpush1.msra.mxu0 0.0
      %87 = vmatprep.subr.mxu0 0.0
      %88 = vmatpush1.msra.mxu0 0.0
      %89 = vmatprep.subr.mxu0 0.0
      %90 = vmatpush1.msra.mxu0 0.0
      %91 = vmatprep.subr.mxu0 0.0
      %92 = vmatpush1.msra.mxu0 0.0
      %93 = vmatprep.subr.mxu0 0.0
      %94 = vmatpush1.msra.mxu0 0.0
      %95 = vmatprep.subr.mxu0 0.0
      %96 = vmatpush1.msra.mxu0 0.0
      %97 = vmatprep.subr.mxu0 0.0
      %98 = vmatpush1.msra.mxu0 0.0
      %99 = vmatprep.subr.mxu0 0.0
      %100 = vmatpush1.msra.mxu0 0.0
      %101 = vmatprep.subr.mxu0 0.0
      %102 = vmatpush1.msra.mxu0 0.0
      %103 = vmatprep.mubr.f32.mxu0 0.0
      %104 = vmatmul.mubr.f32.gmra.mrb[0].mxu0 %v37
      %v105 = vpop.f32.mrb[0].mxu0
      %v106 = vadd.f32 %v33, %v105
      %v107 = vpop.f32.mrb[0].mxu0
      %108 = vdwg.mxu0
      %vm109 = vcmask 261120
      %110 = vst.msk [vmem:[#allocation2] sm:$0xff] %vm109, %v106
    $region25: #{tpu_custom_call.1} parent=1 // pred_fallthru
      _
    %v111 = vld [vmem:[#allocation2] sm:$0xff]
    %v112 = vld [vmem:[%s3] sm:$0xff]
    %v113 = vld [vmem:[%s3 + $0x8] sm:$0xff]
    %v114 = vld [vmem:[%s3 + $0x10] sm:$0xff]
    %v115 = vld [vmem:[%s3 + $0x18] sm:$0xff]
    %v116 = vld [vmem:[%s4] sm:$0x1]
    %v118 = vlaneseq
    %v119 = vshrl.u32 %v118, 7
    %v120 = vsub.s32 0, %v119
    %v121 = vrot.slane %v116, %v120
    %vm123 = vcmask 261120
    %v125 = vsel %vm123, %v111, 0
    %127 = vmatprep.subr.mxu0 0.0
    %128 = vmatpush1.msra.mxu0 %v112
    %129 = vmatprep.subr.mxu0 0.0
    %130 = vmatpush1.msra.mxu0 %v113
    %131 = vmatprep.subr.mxu0 0.0
    %132 = vmatpush1.msra.mxu0 %v114
    %133 = vmatprep.subr.mxu0 0.0
    %134 = vmatpush1.msra.mxu0 %v115
    %135 = vmatprep.subr.mxu0 0.0
    %136 = vmatpush1.msra.mxu0 0.0
    %137 = vmatprep.subr.mxu0 0.0
    %138 = vmatpush1.msra.mxu0 0.0
    %139 = vmatprep.subr.mxu0 0.0
    %140 = vmatpush1.msra.mxu0 0.0
    %141 = vmatprep.subr.mxu0 0.0
    %142 = vmatpush1.msra.mxu0 0.0
    %143 = vmatprep.subr.mxu0 0.0
    %144 = vmatpush1.msra.mxu0 0.0
    %145 = vmatprep.subr.mxu0 0.0
    %146 = vmatpush1.msra.mxu0 0.0
    %147 = vmatprep.subr.mxu0 0.0
    %148 = vmatpush1.msra.mxu0 0.0
    %149 = vmatprep.subr.mxu0 0.0
    %150 = vmatpush1.msra.mxu0 0.0
    %151 = vmatprep.subr.mxu0 0.0
    %152 = vmatpush1.msra.mxu0 0.0
    %153 = vmatprep.subr.mxu0 0.0
    %154 = vmatpush1.msra.mxu0 0.0
    %155 = vmatprep.subr.mxu0 0.0
    %156 = vmatpush1.msra.mxu0 0.0
    %157 = vmatprep.subr.mxu0 0.0
    %158 = vmatpush1.msra.mxu0 0.0
    %159 = vmatprep.subr.mxu0 0.0
    %160 = vmatpush1.msra.mxu0 0.0
    %161 = vmatprep.subr.mxu0 0.0
    %162 = vmatpush1.msra.mxu0 0.0
    %163 = vmatprep.subr.mxu0 0.0
    %164 = vmatpush1.msra.mxu0 0.0
    %165 = vmatprep.subr.mxu0 0.0
    %166 = vmatpush1.msra.mxu0 0.0
    %167 = vmatprep.subr.mxu0 0.0
    %168 = vmatpush1.msra.mxu0 0.0
    %169 = vmatprep.subr.mxu0 0.0
    %170 = vmatpush1.msra.mxu0 0.0
    %171 = vmatprep.subr.mxu0 0.0
    %172 = vmatpush1.msra.mxu0 0.0
    %173 = vmatprep.subr.mxu0 0.0
    %174 = vmatpush1.msra.mxu0 0.0
    %175 = vmatprep.subr.mxu0 0.0
    %176 = vmatpush1.msra.mxu0 0.0
    %177 = vmatprep.subr.mxu0 0.0
    %178 = vmatpush1.msra.mxu0 0.0
    %179 = vmatprep.subr.mxu0 0.0
    %180 = vmatpush1.msra.mxu0 0.0
    %181 = vmatprep.subr.mxu0 0.0
    %182 = vmatpush1.msra.mxu0 0.0
    %183 = vmatprep.subr.mxu0 0.0
    %184 = vmatpush1.msra.mxu0 0.0
    %185 = vmatprep.subr.mxu0 0.0
    %186 = vmatpush1.msra.mxu0 0.0
    %187 = vmatprep.subr.mxu0 0.0
    %188 = vmatpush1.msra.mxu0 0.0
    %189 = vmatprep.subr.mxu0 0.0
    %190 = vmatpush1.msra.mxu0 0.0
    %191 = vmatprep.mubr.f32.mxu0 0.0
    %192 = vmatmul.mubr.f32.gmra.mrb[0].mxu0 %v125
    %v193 = vpop.f32.mrb[0].mxu0
    %v194 = vadd.f32 %v121, %v193
    %v195 = vpop.f32.mrb[0].mxu0
    %196 = vdwg.mxu0
    %v197 = vmax.f32 %v194, 0.0
    %vm198 = vcmask 64512
    %199 = vst.msk [vmem:[#allocation3] sm:$0xff] %vm198, %v197
    // Predicated region
    $region26: #{tpu_custom_call.1} parent=1 // pred_check
      _
    $region27: #{tpu_custom_call.1} parent=1 // pred_check_branch
      %201 = sbr.rel (0) target = $region29
    $region28: #{tpu_custom_call.1} parent=1 // pred_region
      %s203 = ssub.s32 128, 128
      %204 = vsyncadd [#allocation4], %s203
      %s206 = sshll.u32 [#allocation3], 4
      %s207 = int_to_ptr.vmem [resolvable:$true] %s206
      %209 = dma.vmem_to_hbm [thread:$0]  %s207, 128, %s5, [#allocation4]
    $region29: #{tpu_custom_call.1} parent=1 // pred_fallthru
      _
    // Predicated region
    $region30: #{tpu_custom_call.1} parent=1 // pred_check
      _
    $region31: #{tpu_custom_call.1} parent=1 // pred_check_branch
      %211 = sbr.rel (0) target = $region33
    $region32: #{tpu_custom_call.1} parent=1 // pred_region
      %212 = dma.done [#allocation4], 128
    $region33: #{tpu_custom_call.1} parent=1 // pred_fallthru
      _
    %213 = vsyncpa [#allocation4], 1

</llo_original>
